<compile_context>
chip_gen: v7x
topology: tpu7x:2x2x1
jax: 0.10.0
libtpu: 0.0.40
codegen_flags: <defaults>
</compile_context>

<pallas_src>
import functools
import math

import jax
import jax.numpy as jnp
from jax.experimental import pallas as pl
from jax.experimental.pallas import tpu as pltpu


# ---------------------------------------------------------------------------
# Kernel
# ---------------------------------------------------------------------------
def _identity_kernel(x_ref, o_ref):
    # Pure pass-through: copy the current VMEM tile.
    o_ref[...] = x_ref[...]


# ---------------------------------------------------------------------------
# Layout / tiling helpers
# ---------------------------------------------------------------------------
_TILE_BYTES = 2 * 1024 * 1024  # per-tile budget; 2x(in+out) double buffers ~8 MiB
                               # << scoped VMEM on v5e (16 MiB) / v6e / v7x (32 MiB)


def _choose_lane_dense_layout(n):
    """Pick (rows, lanes) with lanes % 128 == 0; prefer rows % 8 == 0."""
    best = None
    for lanes in range(2048, 127, -128):
        if n % lanes:
            continue
        rows = n // lanes
        if rows % 8 == 0:
            return rows, lanes
        if best is None:
            best = (rows, lanes)
    return best  # None if n is not a multiple of 128


def _row_tile(rows, lanes, itemsize):
    per_row = lanes * itemsize
    tb = max(8, (_TILE_BYTES // per_row) // 8 * 8)  # multiple of 8 sublanes
    return min(rows, tb)


@functools.lru_cache(maxsize=None)
def _build_identity_tiled(rows, lanes, tb, dtype_name):
    dtype = jnp.dtype(dtype_name)
    call = pl.pallas_call(
        _identity_kernel,
        out_shape=jax.ShapeDtypeStruct((rows, lanes), dtype),
        grid_spec=pl.GridSpec(
            grid=(pl.cdiv(rows, tb),),
            in_specs=[pl.BlockSpec((tb, lanes), lambda i: (i, 0))],
            out_specs=pl.BlockSpec((tb, lanes), lambda i: (i, 0)),
        ),
        # Output reuses the (donated) input buffer: no fresh HBM allocation.
        input_output_aliases={0: 0},
        compiler_params=pltpu.CompilerParams(
            dimension_semantics=("parallel",),  # megacore-splittable on v7x
        ),
    )
    return jax.jit(call, donate_argnums=(0,))


@functools.lru_cache(maxsize=None)
def _build_identity_full(b, f, dtype_name):
    # Fallback for element counts not divisible by 128: single full-extent
    # block (always satisfies the (8,128) rule because it equals the array).
    dtype = jnp.dtype(dtype_name)
    call = pl.pallas_call(
        _identity_kernel,
        out_shape=jax.ShapeDtypeStruct((b, f), dtype),
        grid_spec=pl.GridSpec(
            grid=(1,),
            in_specs=[pl.BlockSpec((b, f), lambda i: (0, 0))],
            out_specs=pl.BlockSpec((b, f), lambda i: (0, 0)),
        ),
        input_output_aliases={0: 0},
        compiler_params=pltpu.CompilerParams(
            dimension_semantics=("arbitrary",),
        ),
    )
    return jax.jit(call, donate_argnums=(0,))


def pallas_identity(x):
    """Identity on x through an explicit (aliased, tiled) Pallas kernel."""
    orig_shape = x.shape
    dtype_name = jnp.dtype(x.dtype).name
    n = int(math.prod(orig_shape)) if orig_shape else 1
    itemsize = jnp.dtype(x.dtype).itemsize

    layout = _choose_lane_dense_layout(n) if n > 0 else None
    if layout is not None:
        rows, lanes = layout
        tb = _row_tile(rows, lanes, itemsize)
        x2d = x.reshape(rows, lanes)          # fresh buffer -> safe to donate
        y2d = _build_identity_tiled(rows, lanes, tb, dtype_name)(x2d)
        return y2d.reshape(orig_shape)

    # Fallback: (B, F) full-extent block.
    b = orig_shape[0] if len(orig_shape) >= 1 else 1
    x2d = x.reshape(b, -1)
    y2d = _build_identity_full(x2d.shape[0], x2d.shape[1], dtype_name)(x2d)
    return y2d.reshape(orig_shape)


# ---------------------------------------------------------------------------
# Module
# ---------------------------------------------------------------------------
class ModuleBasePallas:
    """JAX/Pallas equivalent of rnnbuilder.base._modules._ModuleBase."""

    def __init__(self, in_shape, use_kernel=False):
        # No parameters (the PyTorch module has none).
        self.in_shape = tuple(in_shape)
        self.out_shape = tuple(in_shape)
        self.use_kernel = use_kernel

    def get_initial_state(self, batch_size):
        return ()

    def get_initial_output(self, batch_size, dtype=jnp.float32):
        # Per perf review: plain fill, fused / constant-folded by XLA.
        # No standalone zero-fill kernel launch.
        return jnp.zeros((batch_size,) + self.out_shape, dtype)

    def forward(self, x, h):
        # forward(x, h) -> (x, h).  Fast path: return x untouched (O(1), no
        # HBM traffic).  If a kernel boundary is explicitly required, route
        # through the aliased, tiled Pallas identity kernel.
        if self.use_kernel:
            return (pallas_identity(x), h)
        return (x, h)

    __call__ = forward


# ---------------------------------------------------------------------------
# Demo / self-check
# ---------------------------------------------------------------------------
if __name__ == "__main__":
    key = jax.random.PRNGKey(0)

    B, C, H, W = 2, 4, 16, 16          # small NCHW input
    in_shape = (C, H, W)

    x = jax.random.normal(key, (B, C, H, W), dtype=jnp.float32)

    # Fast path (review's primary recommendation): pass-through, no kernel.
    mod = ModuleBasePallas(in_shape)
    h0 = mod.get_initial_state(B)                 # ()
    y, h1 = mod(x, h0)                            # identity pass-through
    y0 = mod.get_initial_output(B)                # zeros((B,) + out_shape)

    # Kernel-boundary path: tiled, lane-dense, aliased Pallas identity.
    mod_k = ModuleBasePallas(in_shape, use_kernel=True)
    yk, hk = mod_k(x, h0)

    y, y0, yk = jax.block_until_ready((y, y0, yk))

    assert y.shape == x.shape and y.dtype == x.dtype
    assert jnp.array_equal(y, x)
    assert yk.shape == x.shape and yk.dtype == x.dtype
    assert jnp.array_equal(yk, x)
    assert h0 == () and h1 == () and hk == ()
    assert y0.shape == (B,) + in_shape and y0.dtype == jnp.float32
    assert not bool(jnp.any(y0))

    print("KERNEL_OK")
</pallas_src>

<mosaic_0001>
module attributes {stable_mosaic.version = 11 : i64} {
  func.func @_identity_kernel(%arg0: i32, %arg1: memref<8x256xf32, #tpu.memory_space<vmem>>, %arg2: memref<8x256xf32, #tpu.memory_space<vmem>>) attributes {dimension_semantics = [#tpu.dimension_semantics<parallel>], iteration_bounds = array<i64: 1>, scalar_prefetch = 0 : i64, scratch_operands = 0 : i64, tpu.core_type = #tpu.core_type<tc>, window_params = [{transform_indices = @transform_0, window_bounds = array<i64: 8, 256>}, {transform_indices = @transform_1, window_bounds = array<i64: 8, 256>}]} {
    %c0 = arith.constant 0 : index
    %c0_0 = arith.constant 0 : index
    %0 = vector.load %arg1[%c0, %c0_0] : memref<8x256xf32, #tpu.memory_space<vmem>>, vector<8x256xf32>
    %c0_1 = arith.constant 0 : index
    %c0_2 = arith.constant 0 : index
    %1 = vector.load %arg2[%c0_1, %c0_2] : memref<8x256xf32, #tpu.memory_space<vmem>>, vector<8x256xf32>
    tpu.vector_store %arg2[%c0_1, %c0_2], %0 {strides = array<i32>} : memref<8x256xf32, #tpu.memory_space<vmem>>, vector<8x256xf32>,
    return
  }
  func.func @transform_0(%arg0: i32) -> (i32, i32) {
    %c0_i32 = arith.constant 0 : i32
    %c0_i32_0 = arith.constant 0 : i32
    return %arg0, %c0_i32 : i32, i32
  }
  func.func @transform_1(%arg0: i32) -> (i32, i32) {
    %c0_i32 = arith.constant 0 : i32
    %c0_i32_0 = arith.constant 0 : i32
    return %arg0, %c0_i32 : i32, i32
  }
}

</mosaic_0001>

<llo_original>
// kernel: tpu_custom_call.1
$region0: #{tpu_custom_call.1}
  #allocation0 [shape = 'u32[]', space=smem, size = 0x4, offset = 0x4, fixed_abs, tag = 'smem constant byte address 0x4 - core index']
  #allocation1 [shape = 'u32[144,128]{1,0:T(1,128)}', space=vmem, size = 0x12000, scoped, tag = 'internal scratch']
  %s0 = inlined_call_operand.hbm [shape: f32[8,256], index: 0, kind: input, shape index: {}, may-alias: {0,1}]
  %s1 = inlined_call_operand.hbm [shape: f32[8,256], index: 1, kind: output, shape index: {}, may-alias: {0,1}]
  %s2 = sld [smem:[#allocation0]]
  $region18: #{tpu_custom_call.1} parent=0
    _
  %s4 = ssub.s32 1, %s2
  %s5 = scalar_select 0, %s4, %s2
  $region1: #{tpu_custom_call.1} parent=0
    #allocation2 [shape = 'u8[8192]{0}', space=vmem, size = 0x2000, scoped, tag = 'input window, operand 0, single buffered']
    #allocation3 [shape = 's32[1]{0}', space=sflag, size = 0x4, scoped, tag = 'scoped memory for tpu_custom_call.1']
    #allocation4 [shape = 's32[1]{0}', space=sflag, size = 0x4, scoped, tag = 'scoped memory for tpu_custom_call.1']
    #allocation5 [shape = 'u8[8192]{0}', space=vmem, size = 0x2000, scoped, tag = 'output window, operand 0, single buffered']
    %6 = vsyncpa [#allocation3], 0
    %7 = vsyncpa [#allocation4], 0
    // Predicated region
    $region2: #{tpu_custom_call.1} parent=1 // pred_check
      _
    $region3: #{tpu_custom_call.1} parent=1 // pred_check_branch
      %9 = sbr.rel (0) target = $region5
    $region4: #{tpu_custom_call.1} parent=1 // pred_region
      %s11 = ssub.s32 256, 256
      %12 = vsyncadd [#allocation3], %s11
      %s14 = sshll.u32 [#allocation2], 4
      %s15 = int_to_ptr.vmem [resolvable:$true] %s14
      %17 = dma.hbm_to_vmem [thread:$0]  %s0, 256, %s15, [#allocation3]
    $region5: #{tpu_custom_call.1} parent=1 // pred_fallthru
      _
    // Predicated region
    $region6: #{tpu_custom_call.1} parent=1 // pred_check
      _
    $region7: #{tpu_custom_call.1} parent=1 // pred_check_branch
      %19 = sbr.rel (0) target = $region9
    $region8: #{tpu_custom_call.1} parent=1 // pred_region
      %20 = dma.done [#allocation3], 256
    $region9: #{tpu_custom_call.1} parent=1 // pred_fallthru
      _
    %v21 = vld [vmem:[#allocation2] sm:$0xff]
    %v22 = vld [vmem:[#allocation2 + $0x8] sm:$0xff]
    %23 = vst [vmem:[#allocation5] sm:$0xff] %v21
    %24 = vst [vmem:[#allocation5 + $0x8] sm:$0xff] %v22
    // Predicated region
    $region10: #{tpu_custom_call.1} parent=1 // pred_check
      _
    $region11: #{tpu_custom_call.1} parent=1 // pred_check_branch
      %26 = sbr.rel (0) target = $region13
    $region12: #{tpu_custom_call.1} parent=1 // pred_region
      %s28 = ssub.s32 256, 256
      %29 = vsyncadd [#allocation4], %s28
      %s31 = sshll.u32 [#allocation5], 4
      %s32 = int_to_ptr.vmem [resolvable:$true] %s31
      %34 = dma.vmem_to_hbm [thread:$0]  %s32, 256, %s1, [#allocation4]
    $region13: #{tpu_custom_call.1} parent=1 // pred_fallthru
      _
    // Predicated region
    $region14: #{tpu_custom_call.1} parent=1 // pred_check
      _
    $region15: #{tpu_custom_call.1} parent=1 // pred_check_branch
      %36 = sbr.rel (0) target = $region17
    $region16: #{tpu_custom_call.1} parent=1 // pred_region
      %37 = dma.done [#allocation4], 256
    $region17: #{tpu_custom_call.1} parent=1 // pred_fallthru
      _
    %38 = vsyncpa [#allocation3], 1
    %39 = vsyncpa [#allocation4], 1

</llo_original>
